<compile_context>
chip_gen: v6e
topology: v6e:2x2x1
jax: 0.10.0
libtpu: 0.0.40
codegen_flags: <defaults>
</compile_context>

<pallas_src>
import functools
import math

import jax
import jax.numpy as jnp
from jax.experimental import pallas as pl
from jax.experimental.pallas import tpu as pltpu

_LANE = 128
_SUBLANE = 8


def _round_up(x: int, m: int) -> int:
    return ((x + m - 1) // m) * m


def _mlp_kernel(x_ref, w1_ref, b1_ref, w2_ref, b2_ref, w3_ref, b3_ref, o_ref,
                *, use_softmax: bool, t: float, compute_dtype, approx_recip: bool):
    """Per-batch-tile hot path: optional softmax + 3 matmuls + 2 ReLUs, all in VMEM."""
    x = x_ref[...]

    if use_softmax:
        # Numerically-stable softmax in f32 (exact over the un-padded input_dim).
        z = x.astype(jnp.float32) * jnp.float32(1.0 / t)
        z = z - jnp.max(z, axis=-1, keepdims=True)
        e = jnp.exp(z)
        denom = jnp.sum(e, axis=-1, keepdims=True)
        x = e * pl.reciprocal(denom, approx=approx_recip)

    h = jnp.dot(x.astype(compute_dtype), w1_ref[...],
                preferred_element_type=jnp.float32) + b1_ref[...]
    h = jnp.maximum(h, 0.0)
    h = jnp.dot(h.astype(compute_dtype), w2_ref[...],
                preferred_element_type=jnp.float32) + b2_ref[...]
    h = jnp.maximum(h, 0.0)
    o = jnp.dot(h.astype(compute_dtype), w3_ref[...],
                preferred_element_type=jnp.float32) + b3_ref[...]
    o_ref[...] = o.astype(o_ref.dtype)


def time_softmax_model_forward(x, params, *, use_softmax=False, t=1.0,
                               compute_dtype=jnp.bfloat16, tb=512):
    """Fused MLP Pallas kernel.

    x: [B, input_dim] float32.
    params: (w1, b1, w2, b2, w3, b3) with weights stored as [in, out]
            (transposed vs. PyTorch) and biases as [1, out].
    compute_dtype: dtype of the matmul operands (accumulation is always f32).
    tb: batch tile size (rows per grid step).
    """
    w1, b1, w2, b2, w3, b3 = params
    batch, input_dim = x.shape
    hidden_dim = w1.shape[1]
    output_dim = w3.shape[1]
    out_dtype = x.dtype
    f32_compute = jnp.dtype(compute_dtype) == jnp.dtype(jnp.float32)

    # --- Pad hidden/output dims to lane-dense multiples of 128. Zero padding is
    # semantics-preserving: zero weight columns/rows + zero bias give 0 through
    # ReLU and contribute nothing to subsequent matmuls; padded output columns
    # are sliced off below.
    hid_p = _round_up(hidden_dim, _LANE)
    out_p = _round_up(output_dim, _LANE)

    def pad2(a, rows, cols):
        return jnp.pad(a, ((0, rows - a.shape[0]), (0, cols - a.shape[1])))

    w1p = pad2(w1, input_dim, hid_p).astype(compute_dtype)
    b1p = pad2(b1, 1, hid_p).astype(jnp.float32)
    w2p = pad2(w2, hid_p, hid_p).astype(compute_dtype)
    b2p = pad2(b2, 1, hid_p).astype(jnp.float32)
    w3p = pad2(w3, hid_p, out_p).astype(compute_dtype)
    b3p = pad2(b3, 1, out_p).astype(jnp.float32)

    # --- Batch tiling: big tile (multiple of 8 sublanes); pad batch to a whole
    # number of tiles (padded rows are discarded after the call).
    tb = max(_SUBLANE, min(_round_up(tb, _SUBLANE), _round_up(batch, _SUBLANE)))
    batch_p = _round_up(batch, tb)

    xs = x.astype(compute_dtype)          # halves the streamed HBM bytes for bf16
    if batch_p != batch:
        xs = jnp.pad(xs, ((0, batch_p - batch), (0, 0)))

    grid = (batch_p // tb,)

    kernel = functools.partial(
        _mlp_kernel,
        use_softmax=bool(use_softmax),
        t=float(t),
        compute_dtype=compute_dtype,
        approx_recip=not f32_compute)

    flops = 2 * batch_p * (input_dim * hid_p + hid_p * hid_p + hid_p * out_p)
    transcendentals = batch_p * input_dim if use_softmax else 0
    bytes_accessed = (
        xs.size * xs.dtype.itemsize
        + sum(a.size * a.dtype.itemsize for a in (w1p, b1p, w2p, b2p, w3p, b3p))
        + batch_p * out_p * jnp.dtype(out_dtype).itemsize)

    out_padded = pl.pallas_call(
        kernel,
        out_shape=jax.ShapeDtypeStruct((batch_p, out_p), out_dtype),
        grid=grid,
        in_specs=[
            pl.BlockSpec((tb, input_dim), lambda i: (i, 0)),       # x tile (streamed)
            pl.BlockSpec((input_dim, hid_p), lambda i: (0, 0)),    # w1 (VMEM-resident)
            pl.BlockSpec((1, hid_p), lambda i: (0, 0)),            # b1
            pl.BlockSpec((hid_p, hid_p), lambda i: (0, 0)),        # w2
            pl.BlockSpec((1, hid_p), lambda i: (0, 0)),            # b2
            pl.BlockSpec((hid_p, out_p), lambda i: (0, 0)),        # w3
            pl.BlockSpec((1, out_p), lambda i: (0, 0)),            # b3
        ],
        out_specs=pl.BlockSpec((tb, out_p), lambda i: (i, 0)),
        compiler_params=pltpu.CompilerParams(
            dimension_semantics=("parallel",),
            vmem_limit_bytes=32 * 1024 * 1024),
        cost_estimate=pl.CostEstimate(
            flops=flops,
            transcendentals=transcendentals,
            bytes_accessed=bytes_accessed),
    )(xs, w1p, b1p, w2p, b2p, w3p, b3p)

    return out_padded[:batch, :output_dim]


def init_params(key, input_dim, hidden_dim, output_dim):
    """Deterministic init matching the PyTorch module:
    - weights (dim > 1): xavier_uniform_
    - biases: default nn.Linear init, U(-1/sqrt(fan_in), 1/sqrt(fan_in))
    Weights are stored as [in, out] (transposed vs. PyTorch's [out, in])."""
    keys = jax.random.split(key, 6)

    def xavier(k, fan_in, fan_out):
        bound = math.sqrt(6.0 / (fan_in + fan_out))
        return jax.random.uniform(k, (fan_in, fan_out), jnp.float32, -bound, bound)

    def bias(k, fan_in, fan_out):
        bound = 1.0 / math.sqrt(fan_in)
        return jax.random.uniform(k, (1, fan_out), jnp.float32, -bound, bound)

    w1 = xavier(keys[0], input_dim, hidden_dim)
    b1 = bias(keys[1], input_dim, hidden_dim)
    w2 = xavier(keys[2], hidden_dim, hidden_dim)
    b2 = bias(keys[3], hidden_dim, hidden_dim)
    w3 = xavier(keys[4], hidden_dim, output_dim)
    b3 = bias(keys[5], hidden_dim, output_dim)
    return (w1, b1, w2, b2, w3, b3)


def _reference_forward(x, params, *, use_softmax=False, t=1.0):
    """Pure-JAX reference (mirrors the PyTorch forward)."""
    w1, b1, w2, b2, w3, b3 = params
    out = x
    if use_softmax:
        out = jax.nn.softmax(out / t, axis=-1)
    out = jnp.maximum(out @ w1 + b1, 0.0)
    out = jnp.maximum(out @ w2 + b2, 0.0)
    return out @ w3 + b3


if __name__ == "__main__":
    # Small shapes consistent with the module: [batch, input_dim] input.
    batch, input_dim, hidden_dim, output_dim = 8, 32, 64, 16
    t = 2.0

    key = jax.random.PRNGKey(0)
    k_x, k_p = jax.random.split(key)
    x = jax.random.normal(k_x, (batch, input_dim), jnp.float32)
    params = init_params(k_p, input_dim, hidden_dim, output_dim)

    ok = True

    # 1) Softmax path, f32 matmul operands (exact reciprocal): tight tolerance.
    ref_sm = _reference_forward(x, params, use_softmax=True, t=t)
    out_f32 = jax.block_until_ready(time_softmax_model_forward(
        x, params, use_softmax=True, t=t, compute_dtype=jnp.float32))
    ok &= out_f32.shape == (batch, output_dim)
    ok &= bool(jnp.allclose(out_f32, ref_sm, atol=1e-5, rtol=1e-5))

    # 2) No-softmax path, default bf16 perf config: looser tolerance.
    ref_plain = _reference_forward(x, params, use_softmax=False, t=t)
    out_bf16 = jax.block_until_ready(time_softmax_model_forward(
        x, params, use_softmax=False, t=t))
    ok &= out_bf16.shape == (batch, output_dim)
    ok &= bool(jnp.allclose(out_bf16, ref_plain, atol=5e-2, rtol=5e-2))

    if ok:
        print("KERNEL_OK")
    else:
        print("KERNEL_MISMATCH")
</pallas_src>

<mosaic_0001>
module attributes {stable_mosaic.version = 11 : i64} {
  func.func @_mlp_kernel(%arg0: i32, %arg1: memref<8x32xf32, #tpu.memory_space<vmem>>, %arg2: memref<32x128xf32, #tpu.memory_space<vmem>>, %arg3: memref<1x128xf32, #tpu.memory_space<vmem>>, %arg4: memref<128x128xf32, #tpu.memory_space<vmem>>, %arg5: memref<1x128xf32, #tpu.memory_space<vmem>>, %arg6: memref<128x128xf32, #tpu.memory_space<vmem>>, %arg7: memref<1x128xf32, #tpu.memory_space<vmem>>, %arg8: memref<8x128xf32, #tpu.memory_space<vmem>>) attributes {dimension_semantics = [#tpu.dimension_semantics<parallel>], iteration_bounds = array<i64: 1>, scalar_prefetch = 0 : i64, scratch_operands = 0 : i64, tpu.core_type = #tpu.core_type<tc>, window_params = [{transform_indices = @transform_0, window_bounds = array<i64: 8, 32>}, {pipeline_mode = #tpu.pipeline_mode<synchronous>, transform_indices = @transform_1, window_bounds = array<i64: 32, 128>}, {pipeline_mode = #tpu.pipeline_mode<synchronous>, transform_indices = @transform_2, window_bounds = array<i64: 1, 128>}, {pipeline_mode = #tpu.pipeline_mode<synchronous>, transform_indices = @transform_3, window_bounds = array<i64: 128, 128>}, {pipeline_mode = #tpu.pipeline_mode<synchronous>, transform_indices = @transform_4, window_bounds = array<i64: 1, 128>}, {pipeline_mode = #tpu.pipeline_mode<synchronous>, transform_indices = @transform_5, window_bounds = array<i64: 128, 128>}, {pipeline_mode = #tpu.pipeline_mode<synchronous>, transform_indices = @transform_6, window_bounds = array<i64: 1, 128>}, {transform_indices = @transform_7, window_bounds = array<i64: 8, 128>}]} {
    %c0 = arith.constant 0 : index
    %c0_0 = arith.constant 0 : index
    %0 = vector.load %arg1[%c0, %c0_0] : memref<8x32xf32, #tpu.memory_space<vmem>>, vector<8x32xf32>
    %cst = arith.constant 5.000000e-01 : f32
    %1 = vector.broadcast %cst : f32 to vector<8x32xf32>
    %2 = arith.mulf %0, %1 : vector<8x32xf32>
    %cst_1 = arith.constant dense<0xFF800000> : vector<8xf32>
    %3 = vector.multi_reduction <maximumf>, %2, %cst_1 [1] : vector<8x32xf32> to vector<8xf32>
    %4 = vector.shape_cast %3 : vector<8xf32> to vector<8x1xf32>
    %5 = vector.broadcast %4 : vector<8x1xf32> to vector<8x32xf32>
    %6 = arith.subf %2, %5 : vector<8x32xf32>
    %7 = math.exp %6 : vector<8x32xf32>
    %cst_2 = arith.constant dense<0.000000e+00> : vector<8xf32>
    %8 = vector.multi_reduction <add>, %7, %cst_2 [1] : vector<8x32xf32> to vector<8xf32>
    %9 = vector.shape_cast %8 : vector<8xf32> to vector<8x1xf32>
    %10 = tpu.reciprocal %9 : vector<8x1xf32> -> vector<8x1xf32>
    %11 = vector.broadcast %10 : vector<8x1xf32> to vector<8x32xf32>
    %12 = arith.mulf %7, %11 : vector<8x32xf32>
    %c0_3 = arith.constant 0 : index
    %c0_4 = arith.constant 0 : index
    %13 = vector.load %arg2[%c0_3, %c0_4] : memref<32x128xf32, #tpu.memory_space<vmem>>, vector<32x128xf32>
    %cst_5 = arith.constant dense<0.000000e+00> : vector<8x128xf32>
    %14 = tpu.matmul %12, %13, %cst_5 {dimension_numbers = #tpu.dot_dimension_numbers<[1], [0], [0], [1], [0, 0, 1, 1], [], []>} : vector<8x32xf32>, vector<32x128xf32>, vector<8x128xf32> -> vector<8x128xf32>
    %c0_6 = arith.constant 0 : index
    %c0_7 = arith.constant 0 : index
    %15 = vector.load %arg3[%c0_6, %c0_7] : memref<1x128xf32, #tpu.memory_space<vmem>>, vector<1x128xf32>
    %16 = vector.broadcast %15 : vector<1x128xf32> to vector<8x128xf32>
    %17 = arith.addf %14, %16 : vector<8x128xf32>
    %cst_8 = arith.constant 0.000000e+00 : f32
    %18 = vector.broadcast %cst_8 : f32 to vector<8x128xf32>
    %19 = arith.maximumf %17, %18 : vector<8x128xf32>
    %c0_9 = arith.constant 0 : index
    %c0_10 = arith.constant 0 : index
    %20 = vector.load %arg4[%c0_9, %c0_10] : memref<128x128xf32, #tpu.memory_space<vmem>>, vector<128x128xf32>
    %cst_11 = arith.constant dense<0.000000e+00> : vector<8x128xf32>
    %21 = tpu.matmul %19, %20, %cst_11 {dimension_numbers = #tpu.dot_dimension_numbers<[1], [0], [0], [1], [0, 0, 1, 1], [], []>} : vector<8x128xf32>, vector<128x128xf32>, vector<8x128xf32> -> vector<8x128xf32>
    %c0_12 = arith.constant 0 : index
    %c0_13 = arith.constant 0 : index
    %22 = vector.load %arg5[%c0_12, %c0_13] : memref<1x128xf32, #tpu.memory_space<vmem>>, vector<1x128xf32>
    %23 = vector.broadcast %22 : vector<1x128xf32> to vector<8x128xf32>
    %24 = arith.addf %21, %23 : vector<8x128xf32>
    %cst_14 = arith.constant 0.000000e+00 : f32
    %25 = vector.broadcast %cst_14 : f32 to vector<8x128xf32>
    %26 = arith.maximumf %24, %25 : vector<8x128xf32>
    %c0_15 = arith.constant 0 : index
    %c0_16 = arith.constant 0 : index
    %27 = vector.load %arg6[%c0_15, %c0_16] : memref<128x128xf32, #tpu.memory_space<vmem>>, vector<128x128xf32>
    %cst_17 = arith.constant dense<0.000000e+00> : vector<8x128xf32>
    %28 = tpu.matmul %26, %27, %cst_17 {dimension_numbers = #tpu.dot_dimension_numbers<[1], [0], [0], [1], [0, 0, 1, 1], [], []>} : vector<8x128xf32>, vector<128x128xf32>, vector<8x128xf32> -> vector<8x128xf32>
    %c0_18 = arith.constant 0 : index
    %c0_19 = arith.constant 0 : index
    %29 = vector.load %arg7[%c0_18, %c0_19] : memref<1x128xf32, #tpu.memory_space<vmem>>, vector<1x128xf32>
    %30 = vector.broadcast %29 : vector<1x128xf32> to vector<8x128xf32>
    %31 = arith.addf %28, %30 : vector<8x128xf32>
    %c0_20 = arith.constant 0 : index
    %c0_21 = arith.constant 0 : index
    %32 = vector.load %arg8[%c0_20, %c0_21] : memref<8x128xf32, #tpu.memory_space<vmem>>, vector<8x128xf32>
    tpu.vector_store %arg8[%c0_20, %c0_21], %31 {strides = array<i32>} : memref<8x128xf32, #tpu.memory_space<vmem>>, vector<8x128xf32>,
    return
  }
  func.func @transform_0(%arg0: i32) -> (i32, i32) {
    %c0_i32 = arith.constant 0 : i32
    %c0_i32_0 = arith.constant 0 : i32
    return %arg0, %c0_i32 : i32, i32
  }
  func.func @transform_1(%arg0: i32) -> (i32, i32) {
    %c0_i32 = arith.constant 0 : i32
    %c0_i32_0 = arith.constant 0 : i32
    %c0_i32_1 = arith.constant 0 : i32
    return %c0_i32, %c0_i32_0 : i32, i32
  }
  func.func @transform_2(%arg0: i32) -> (i32, i32) {
    %c0_i32 = arith.constant 0 : i32
    %c0_i32_0 = arith.constant 0 : i32
    %c0_i32_1 = arith.constant 0 : i32
    return %c0_i32, %c0_i32_0 : i32, i32
  }
  func.func @transform_3(%arg0: i32) -> (i32, i32) {
    %c0_i32 = arith.constant 0 : i32
    %c0_i32_0 = arith.constant 0 : i32
    %c0_i32_1 = arith.constant 0 : i32
    return %c0_i32, %c0_i32_0 : i32, i32
  }
  func.func @transform_4(%arg0: i32) -> (i32, i32) {
    %c0_i32 = arith.constant 0 : i32
    %c0_i32_0 = arith.constant 0 : i32
    %c0_i32_1 = arith.constant 0 : i32
    return %c0_i32, %c0_i32_0 : i32, i32
  }
  func.func @transform_5(%arg0: i32) -> (i32, i32) {
    %c0_i32 = arith.constant 0 : i32
    %c0_i32_0 = arith.constant 0 : i32
    %c0_i32_1 = arith.constant 0 : i32
    return %c0_i32, %c0_i32_0 : i32, i32
  }
  func.func @transform_6(%arg0: i32) -> (i32, i32) {
    %c0_i32 = arith.constant 0 : i32
    %c0_i32_0 = arith.constant 0 : i32
    %c0_i32_1 = arith.constant 0 : i32
    return %c0_i32, %c0_i32_0 : i32, i32
  }
  func.func @transform_7(%arg0: i32) -> (i32, i32) {
    %c0_i32 = arith.constant 0 : i32
    %c0_i32_0 = arith.constant 0 : i32
    return %arg0, %c0_i32 : i32, i32
  }
}

</mosaic_0001>

<llo_original>
// kernel: tpu_custom_call.1
$region0: #{tpu_custom_call.1}
  #allocation0 [shape = 'u32[]', space=smem, size = 0x4, offset = 0x4, fixed_abs, tag = 'smem constant byte address 0x4 - core index']
  #allocation1 [shape = 'u32[144,128]{1,0:T(1,128)}', space=vmem, size = 0x12000, scoped, tag = 'internal scratch']
  %s0 = inlined_call_operand.hbm [shape: f32[8,32], index: 0, kind: input, shape index: {}]
  %s1 = inlined_call_operand.hbm [shape: f32[32,128], index: 1, kind: input, shape index: {}]
  %s2 = inlined_call_operand.vmem [shape: f32[1,128], index: 2, kind: input, shape index: {}]
  %s3 = inlined_call_operand.hbm [shape: f32[128,128], index: 3, kind: input, shape index: {}]
  %s4 = inlined_call_operand.vmem [shape: f32[1,128], index: 4, kind: input, shape index: {}]
  %s5 = inlined_call_operand.hbm [shape: f32[128,128], index: 5, kind: input, shape index: {}]
  %s6 = inlined_call_operand.vmem [shape: f32[1,128], index: 6, kind: input, shape index: {}]
  %s7 = inlined_call_operand.hbm [shape: f32[8,128], index: 7, kind: output, shape index: {}]
  %s8 = sld [smem:[#allocation0]]
  $region54: #{tpu_custom_call.1} parent=0
    _
  %s10 = ssub.s32 1, %s8
  %s11 = scalar_select 0, %s10, %s8
  $region1: #{tpu_custom_call.1} parent=0
    #allocation2 [shape = 'u8[4096]{0}', space=vmem, size = 0x1000, scoped, tag = 'input window, operand 0, single buffered']
    #allocation3 [shape = 's32[1]{0}', space=sflag, size = 0x4, scoped, tag = 'scoped memory for tpu_custom_call.1']
    #allocation4 [shape = 's32[1]{0}', space=sflag, size = 0x4, scoped, tag = 'scoped memory for tpu_custom_call.1']
    #allocation5 [shape = 'u8[16384]{0}', space=vmem, size = 0x4000, scoped, tag = 'input window, operand 1, single buffered']
    #allocation6 [shape = 's32[1]{0}', space=sflag, size = 0x4, scoped, tag = 'scoped memory for tpu_custom_call.1']
    #allocation7 [shape = 'u8[65536]{0}', space=vmem, size = 0x10000, scoped, tag = 'input window, operand 3, single buffered']
    #allocation8 [shape = 'u8[65536]{0}', space=vmem, size = 0x10000, scoped, tag = 'input window, operand 5, single buffered']
    #allocation9 [shape = 's32[1]{0}', space=sflag, size = 0x4, scoped, tag = 'scoped memory for tpu_custom_call.1']
    #allocation10 [shape = 'u8[4096]{0}', space=vmem, size = 0x1000, scoped, tag = 'output window, operand 0, single buffered']
    %12 = vsyncpa [#allocation3], 0
    %13 = vsyncpa [#allocation6], 0
    %14 = vsyncpa [#allocation9], 0
    %15 = vsyncpa [#allocation4], 0
    // Predicated region
    $region2: #{tpu_custom_call.1} parent=1 // pred_check
      _
    $region3: #{tpu_custom_call.1} parent=1 // pred_check_branch
      %17 = sbr.rel (0) target = $region5
    $region4: #{tpu_custom_call.1} parent=1 // pred_region
      %s19 = ssub.s32 128, 128
      %20 = vsyncadd [#allocation3], %s19
      %s22 = sshll.u32 [#allocation2], 4
      %s23 = int_to_ptr.vmem [resolvable:$true] %s22
      %25 = dma.hbm_to_vmem [thread:$0]  %s0, 128, %s23, [#allocation3]
    $region5: #{tpu_custom_call.1} parent=1 // pred_fallthru
      _
    // Predicated region
    $region6: #{tpu_custom_call.1} parent=1 // pred_check
      _
    $region7: #{tpu_custom_call.1} parent=1 // pred_check_branch
      %27 = sbr.rel (0) target = $region9
    $region8: #{tpu_custom_call.1} parent=1 // pred_region
      %s29 = ssub.s32 512, 512
      %30 = vsyncadd [#allocation6], %s29
      %s31 = sshll.u32 [#allocation5], 4
      %s32 = int_to_ptr.vmem [resolvable:$true] %s31
      %37 = dma.hbm_to_vmem [thread:$0]  %s1, 512, %s32, [#allocation6], 128, 128, 8
    $region9: #{tpu_custom_call.1} parent=1 // pred_fallthru
      _
    // Predicated region
    $region10: #{tpu_custom_call.1} parent=1 // pred_check
      _
    $region11: #{tpu_custom_call.1} parent=1 // pred_check_branch
      %39 = sbr.rel (0) target = $region13
    $region12: #{tpu_custom_call.1} parent=1 // pred_region
      _
    $region13: #{tpu_custom_call.1} parent=1 // pred_fallthru
      _
    // Predicated region
    $region14: #{tpu_custom_call.1} parent=1 // pred_check
      _
    $region15: #{tpu_custom_call.1} parent=1 // pred_check_branch
      %41 = sbr.rel (0) target = $region17
    $region16: #{tpu_custom_call.1} parent=1 // pred_region
      %s43 = ssub.s32 2048, 2048
      %44 = vsyncadd [#allocation6], %s43
      %s45 = sshll.u32 [#allocation7], 4
      %s46 = int_to_ptr.vmem [resolvable:$true] %s45
      %51 = dma.hbm_to_vmem [thread:$0]  %s3, 2048, %s46, [#allocation6], 128, 128, 8
    $region17: #{tpu_custom_call.1} parent=1 // pred_fallthru
      _
    // Predicated region
    $region18: #{tpu_custom_call.1} parent=1 // pred_check
      _
    $region19: #{tpu_custom_call.1} parent=1 // pred_check_branch
      %53 = sbr.rel (0) target = $region21
    $region20: #{tpu_custom_call.1} parent=1 // pred_region
      _
    $region21: #{tpu_custom_call.1} parent=1 // pred_fallthru
      _
    // Predicated region
    $region22: #{tpu_custom_call.1} parent=1 // pred_check
      _
    $region23: #{tpu_custom_call.1} parent=1 // pred_check_branch
      %55 = sbr.rel (0) target = $region25
    $region24: #{tpu_custom_call.1} parent=1 // pred_region
      %s57 = ssub.s32 2048, 2048
      %58 = vsyncadd [#allocation9], %s57
      %s59 = sshll.u32 [#allocation8], 4
      %s60 = int_to_ptr.vmem [resolvable:$true] %s59
      %65 = dma.hbm_to_vmem [thread:$0]  %s5, 2048, %s60, [#allocation9], 128, 128, 8
    $region25: #{tpu_custom_call.1} parent=1 // pred_fallthru
      _
    // Predicated region
    $region26: #{tpu_custom_call.1} parent=1 // pred_check
      _
    $region27: #{tpu_custom_call.1} parent=1 // pred_check_branch
      %67 = sbr.rel (0) target = $region29
    $region28: #{tpu_custom_call.1} parent=1 // pred_region
      _
    $region29: #{tpu_custom_call.1} parent=1 // pred_fallthru
      _
    // Predicated region
    $region30: #{tpu_custom_call.1} parent=1 // pred_check
      _
    $region31: #{tpu_custom_call.1} parent=1 // pred_check_branch
      %69 = sbr.rel (0) target = $region33
    $region32: #{tpu_custom_call.1} parent=1 // pred_region
      %70 = dma.done [#allocation3], 128
    $region33: #{tpu_custom_call.1} parent=1 // pred_fallthru
      _
    // Predicated region
    $region34: #{tpu_custom_call.1} parent=1 // pred_check
      _
    $region35: #{tpu_custom_call.1} parent=1 // pred_check_branch
      %72 = sbr.rel (0) target = $region37
    $region36: #{tpu_custom_call.1} parent=1 // pred_region
      %73 = dma.done [#allocation6], 512
    $region37: #{tpu_custom_call.1} parent=1 // pred_fallthru
      _
    // Predicated region
    $region38: #{tpu_custom_call.1} parent=1 // pred_check
      _
    $region39: #{tpu_custom_call.1} parent=1 // pred_check_branch
      %75 = sbr.rel (0) target = $region41
    $region40: #{tpu_custom_call.1} parent=1 // pred_region
      %76 = dma.done [#allocation6], 2048
    $region41: #{tpu_custom_call.1} parent=1 // pred_fallthru
      _
    // Predicated region
    $region42: #{tpu_custom_call.1} parent=1 // pred_check
      _
    $region43: #{tpu_custom_call.1} parent=1 // pred_check_branch
      %78 = sbr.rel (0) target = $region45
    $region44: #{tpu_custom_call.1} parent=1 // pred_region
      %79 = dma.done [#allocation9], 2048
    $region45: #{tpu_custom_call.1} parent=1 // pred_fallthru
      _
    %v80 = vld [vmem:[#allocation2] sm:$0xff]
    %v81 = vmul.f32 %v80, 0.5
    %vm82 = vcmask 261120
    %v83 = vsel %vm82, %v81, -inf
    %84 = vmax.xlane.f32.xlu0 %v83
    %v85 = vpop.xlane.xlu0 %84
    %v86 = vsub.f32 %v81, %v85
    %v87 = vmul.f32 %v86, 1.442695
    %v88 = vpow.pop %v87
    %v89 = vsel %vm82, %v88, 0.0
    %90 = vadd.xlane.f32.xlu0 %v89
    %v91 = vpop.xlane.xlu0 %90
    %v92 = vrcp.pop %v91
    %v93 = vmul.f32 %v88, %v92
    %v94 = vld [vmem:[#allocation5] sm:$0xff]
    %v95 = vld [vmem:[#allocation5 + $0x8] sm:$0xff]
    %v96 = vld [vmem:[#allocation5 + $0x10] sm:$0xff]
    %v97 = vld [vmem:[#allocation5 + $0x18] sm:$0xff]
    %v98 = vld [vmem:[%s2] sm:$0x1]
    %v100 = vlaneseq
    %v101 = vshrl.u32 %v100, 7
    %v102 = vsub.s32 0, %v101
    %v103 = vrot.slane %v98, %v102
    %v106 = vsel %vm82, %v93, 0
    %108 = vmatprep.subr.mxu0 0.0
    %109 = vmatpush1.msra.mxu0 0.0
    %110 = vmatprep.subr.mxu0 0.0
    %111 = vmatpush1.msra.mxu0 0.0
    %112 = vmatprep.subr.mxu0 0.0
    %113 = vmatpush1.msra.mxu0 0.0
    %114 = vmatprep.subr.mxu0 0.0
    %115 = vmatpush1.msra.mxu0 0.0
    %116 = vmatprep.subr.mxu0 0.0
    %117 = vmatpush1.msra.mxu0 0.0
    %118 = vmatprep.subr.mxu0 0.0
    %119 = vmatpush1.msra.mxu0 0.0
    %120 = vmatprep.subr.mxu0 0.0
    %121 = vmatpush1.msra.mxu0 0.0
    %122 = vmatprep.subr.mxu0 0.0
    %123 = vmatpush1.msra.mxu0 0.0
    %124 = vmatprep.subr.mxu0 0.0
    %125 = vmatpush1.msra.mxu0 0.0
    %126 = vmatprep.subr.mxu0 0.0
    %127 = vmatpush1.msra.mxu0 0.0
    %128 = vmatprep.subr.mxu0 0.0
    %129 = vmatpush1.msra.mxu0 0.0
    %130 = vmatprep.subr.mxu0 0.0
    %131 = vmatpush1.msra.mxu0 0.0
    %132 = vmatprep.subr.mxu0 0.0
    %133 = vmatpush1.msra.mxu0 %v97
    %134 = vmatprep.subr.mxu0 0.0
    %135 = vmatpush1.msra.mxu0 %v96
    %136 = vmatprep.subr.mxu0 0.0
    %137 = vmatpush1.msra.mxu0 %v95
    %138 = vmatprep.subr.mxu0 0.0
    %139 = vmatpush1.msra.mxu0 %v94
    %140 = vmatprep.subr.mxu0 0.0
    %141 = vmatpush2.msra.mxu0 0.0
    %142 = vmatprep.subr.mxu0 0.0
    %143 = vmatpush2.msra.mxu0 0.0
    %144 = vmatprep.subr.mxu0 0.0
    %145 = vmatpush2.msra.mxu0 0.0
    %146 = vmatprep.subr.mxu0 0.0
    %147 = vmatpush2.msra.mxu0 0.0
    %148 = vmatprep.subr.mxu0 0.0
    %149 = vmatpush2.msra.mxu0 0.0
    %150 = vmatprep.subr.mxu0 0.0
    %151 = vmatpush2.msra.mxu0 0.0
    %152 = vmatprep.subr.mxu0 0.0
    %153 = vmatpush2.msra.mxu0 0.0
    %154 = vmatprep.subr.mxu0 0.0
    %155 = vmatpush2.msra.mxu0 0.0
    %156 = vmatprep.subr.mxu0 0.0
    %157 = vmatpush2.msra.mxu0 0.0
    %158 = vmatprep.subr.mxu0 0.0
    %159 = vmatpush2.msra.mxu0 0.0
    %160 = vmatprep.subr.mxu0 0.0
    %161 = vmatpush2.msra.mxu0 0.0
    %162 = vmatprep.subr.mxu0 0.0
    %163 = vmatpush2.msra.mxu0 0.0
    %164 = vmatprep.subr.mxu0 0.0
    %165 = vmatpush2.msra.mxu0 0.0
    %166 = vmatprep.subr.mxu0 0.0
    %167 = vmatpush2.msra.mxu0 0.0
    %168 = vmatprep.subr.mxu0 0.0
    %169 = vmatpush2.msra.mxu0 0.0
    %170 = vmatprep.subr.mxu0 0.0
    %171 = vmatpush2.msra.mxu0 0.0
    %172 = vmatprep.mubr.f32.mxu0 0.0
    %173 = vmatmul.mubr.f32.gmra.mxu0 %v106
    %v174 = vpop.f32.mrf.mxu0
    %v175 = vadd.f32 %v103, %v174
    %v176 = vpop.f32.mrf.mxu0
    %177 = vdwg.mxu0
    %v178 = vmax.f32 %v175, 0.0
    %v179 = vld [vmem:[#allocation7] sm:$0xff]
    %v180 = vld [vmem:[#allocation7 + $0x8] sm:$0xff]
    %v181 = vld [vmem:[#allocation7 + $0x10] sm:$0xff]
    %v182 = vld [vmem:[#allocation7 + $0x18] sm:$0xff]
    %v183 = vld [vmem:[#allocation7 + $0x20] sm:$0xff]
    %v184 = vld [vmem:[#allocation7 + $0x28] sm:$0xff]
    %v185 = vld [vmem:[#allocation7 + $0x30] sm:$0xff]
    %v186 = vld [vmem:[#allocation7 + $0x38] sm:$0xff]
    %v187 = vld [vmem:[#allocation7 + $0x40] sm:$0xff]
    %v188 = vld [vmem:[#allocation7 + $0x48] sm:$0xff]
    %v189 = vld [vmem:[#allocation7 + $0x50] sm:$0xff]
    %v190 = vld [vmem:[#allocation7 + $0x58] sm:$0xff]
    %v191 = vld [vmem:[#allocation7 + $0x60] sm:$0xff]
    %v192 = vld [vmem:[#allocation7 + $0x68] sm:$0xff]
    %v193 = vld [vmem:[#allocation7 + $0x70] sm:$0xff]
    %v194 = vld [vmem:[#allocation7 + $0x78] sm:$0xff]
    %v195 = vld [vmem:[%s4] sm:$0x1]
    %v197 = vlaneseq
    %v198 = vshrl.u32 %v197, 7
    %v199 = vsub.s32 0, %v198
    %v200 = vrot.slane %v195, %v199
    %202 = vmatprep.subr.mxu0 0.0
    %203 = vmatpush1.msra.mxu0 %v194
    %204 = vmatprep.subr.mxu0 0.0
    %205 = vmatpush1.msra.mxu0 %v193
    %206 = vmatprep.subr.mxu0 0.0
    %207 = vmatpush1.msra.mxu0 %v192
    %208 = vmatprep.subr.mxu0 0.0
    %209 = vmatpush1.msra.mxu0 %v191
    %210 = vmatprep.subr.mxu0 0.0
    %211 = vmatpush1.msra.mxu0 %v190
    %212 = vmatprep.subr.mxu0 0.0
    %213 = vmatpush1.msra.mxu0 %v189
    %214 = vmatprep.subr.mxu0 0.0
    %215 = vmatpush1.msra.mxu0 %v188
    %216 = vmatprep.subr.mxu0 0.0
    %217 = vmatpush1.msra.mxu0 %v187
    %218 = vmatprep.subr.mxu0 0.0
    %219 = vmatpush1.msra.mxu0 %v186
    %220 = vmatprep.subr.mxu0 0.0
    %221 = vmatpush1.msra.mxu0 %v185
    %222 = vmatprep.subr.mxu0 0.0
    %223 = vmatpush1.msra.mxu0 %v184
    %224 = vmatprep.subr.mxu0 0.0
    %225 = vmatpush1.msra.mxu0 %v183
    %226 = vmatprep.subr.mxu0 0.0
    %227 = vmatpush1.msra.mxu0 %v182
    %228 = vmatprep.subr.mxu0 0.0
    %229 = vmatpush1.msra.mxu0 %v181
    %230 = vmatprep.subr.mxu0 0.0
    %231 = vmatpush1.msra.mxu0 %v180
    %232 = vmatprep.subr.mxu0 0.0
    %233 = vmatpush1.msra.mxu0 %v179
    %234 = vmatprep.subr.mxu0 0.0
    %235 = vmatpush2.msra.mxu0 0.0
    %236 = vmatprep.subr.mxu0 0.0
    %237 = vmatpush2.msra.mxu0 0.0
    %238 = vmatprep.subr.mxu0 0.0
    %239 = vmatpush2.msra.mxu0 0.0
    %240 = vmatprep.subr.mxu0 0.0
    %241 = vmatpush2.msra.mxu0 0.0
    %242 = vmatprep.subr.mxu0 0.0
    %243 = vmatpush2.msra.mxu0 0.0
    %244 = vmatprep.subr.mxu0 0.0
    %245 = vmatpush2.msra.mxu0 0.0
    %246 = vmatprep.subr.mxu0 0.0
    %247 = vmatpush2.msra.mxu0 0.0
    %248 = vmatprep.subr.mxu0 0.0
    %249 = vmatpush2.msra.mxu0 0.0
    %250 = vmatprep.subr.mxu0 0.0
    %251 = vmatpush2.msra.mxu0 0.0
    %252 = vmatprep.subr.mxu0 0.0
    %253 = vmatpush2.msra.mxu0 0.0
    %254 = vmatprep.subr.mxu0 0.0
    %255 = vmatpush2.msra.mxu0 0.0
    %256 = vmatprep.subr.mxu0 0.0
    %257 = vmatpush2.msra.mxu0 0.0
    %258 = vmatprep.subr.mxu0 0.0
    %259 = vmatpush2.msra.mxu0 0.0
    %260 = vmatprep.subr.mxu0 0.0
    %261 = vmatpush2.msra.mxu0 0.0
    %262 = vmatprep.subr.mxu0 0.0
    %263 = vmatpush2.msra.mxu0 0.0
    %264 = vmatprep.subr.mxu0 0.0
    %265 = vmatpush2.msra.mxu0 0.0
    %266 = vmatprep.mubr.f32.mxu0 0.0
    %267 = vmatmul.mubr.f32.gmra.mxu0 %v178
    %v268 = vpop.f32.mrf.mxu0
    %v269 = vadd.f32 %v200, %v268
    %v270 = vpop.f32.mrf.mxu0
    %271 = vdwg.mxu0
    %v272 = vmax.f32 %v269, 0.0
    %v273 = vld [vmem:[#allocation8] sm:$0xff]
    %v274 = vld [vmem:[#allocation8 + $0x8] sm:$0xff]
    %v275 = vld [vmem:[#allocation8 + $0x10] sm:$0xff]
    %v276 = vld [vmem:[#allocation8 + $0x18] sm:$0xff]
    %v277 = vld [vmem:[#allocation8 + $0x20] sm:$0xff]
    %v278 = vld [vmem:[#allocation8 + $0x28] sm:$0xff]
    %v279 = vld [vmem:[#allocation8 + $0x30] sm:$0xff]
    %v280 = vld [vmem:[#allocation8 + $0x38] sm:$0xff]
    %v281 = vld [vmem:[#allocation8 + $0x40] sm:$0xff]
    %v282 = vld [vmem:[#allocation8 + $0x48] sm:$0xff]
    %v283 = vld [vmem:[#allocation8 + $0x50] sm:$0xff]
    %v284 = vld [vmem:[#allocation8 + $0x58] sm:$0xff]
    %v285 = vld [vmem:[#allocation8 + $0x60] sm:$0xff]
    %v286 = vld [vmem:[#allocation8 + $0x68] sm:$0xff]
    %v287 = vld [vmem:[#allocation8 + $0x70] sm:$0xff]
    %v288 = vld [vmem:[#allocation8 + $0x78] sm:$0xff]
    %v289 = vld [vmem:[%s6] sm:$0x1]
    %v291 = vlaneseq
    %v292 = vshrl.u32 %v291, 7
    %v293 = vsub.s32 0, %v292
    %v294 = vrot.slane %v289, %v293
    %296 = vmatprep.subr.mxu0 0.0
    %297 = vmatpush1.msra.mxu0 %v288
    %298 = vmatprep.subr.mxu0 0.0
    %299 = vmatpush1.msra.mxu0 %v287
    %300 = vmatprep.subr.mxu0 0.0
    %301 = vmatpush1.msra.mxu0 %v286
    %302 = vmatprep.subr.mxu0 0.0
    %303 = vmatpush1.msra.mxu0 %v285
    %304 = vmatprep.subr.mxu0 0.0
    %305 = vmatpush1.msra.mxu0 %v284
    %306 = vmatprep.subr.mxu0 0.0
    %307 = vmatpush1.msra.mxu0 %v283
    %308 = vmatprep.subr.mxu0 0.0
    %309 = vmatpush1.msra.mxu0 %v282
    %310 = vmatprep.subr.mxu0 0.0
    %311 = vmatpush1.msra.mxu0 %v281
    %312 = vmatprep.subr.mxu0 0.0
    %313 = vmatpush1.msra.mxu0 %v280
    %314 = vmatprep.subr.mxu0 0.0
    %315 = vmatpush1.msra.mxu0 %v279
    %316 = vmatprep.subr.mxu0 0.0
    %317 = vmatpush1.msra.mxu0 %v278
    %318 = vmatprep.subr.mxu0 0.0
    %319 = vmatpush1.msra.mxu0 %v277
    %320 = vmatprep.subr.mxu0 0.0
    %321 = vmatpush1.msra.mxu0 %v276
    %322 = vmatprep.subr.mxu0 0.0
    %323 = vmatpush1.msra.mxu0 %v275
    %324 = vmatprep.subr.mxu0 0.0
    %325 = vmatpush1.msra.mxu0 %v274
    %326 = vmatprep.subr.mxu0 0.0
    %327 = vmatpush1.msra.mxu0 %v273
    %328 = vmatprep.subr.mxu0 0.0
    %329 = vmatpush2.msra.mxu0 0.0
    %330 = vmatprep.subr.mxu0 0.0
    %331 = vmatpush2.msra.mxu0 0.0
    %332 = vmatprep.subr.mxu0 0.0
    %333 = vmatpush2.msra.mxu0 0.0
    %334 = vmatprep.subr.mxu0 0.0
    %335 = vmatpush2.msra.mxu0 0.0
    %336 = vmatprep.subr.mxu0 0.0
    %337 = vmatpush2.msra.mxu0 0.0
    %338 = vmatprep.subr.mxu0 0.0
    %339 = vmatpush2.msra.mxu0 0.0
    %340 = vmatprep.subr.mxu0 0.0
    %341 = vmatpush2.msra.mxu0 0.0
    %342 = vmatprep.subr.mxu0 0.0
    %343 = vmatpush2.msra.mxu0 0.0
    %344 = vmatprep.subr.mxu0 0.0
    %345 = vmatpush2.msra.mxu0 0.0
    %346 = vmatprep.subr.mxu0 0.0
    %347 = vmatpush2.msra.mxu0 0.0
    %348 = vmatprep.subr.mxu0 0.0
    %349 = vmatpush2.msra.mxu0 0.0
    %350 = vmatprep.subr.mxu0 0.0
    %351 = vmatpush2.msra.mxu0 0.0
    %352 = vmatprep.subr.mxu0 0.0
    %353 = vmatpush2.msra.mxu0 0.0
    %354 = vmatprep.subr.mxu0 0.0
    %355 = vmatpush2.msra.mxu0 0.0
    %356 = vmatprep.subr.mxu0 0.0
    %357 = vmatpush2.msra.mxu0 0.0
    %358 = vmatprep.subr.mxu0 0.0
    %359 = vmatpush2.msra.mxu0 0.0
    %360 = vmatprep.mubr.f32.mxu0 0.0
    %361 = vmatmul.mubr.f32.gmra.mxu0 %v272
    %v362 = vpop.f32.mrf.mxu0
    %v363 = vadd.f32 %v294, %v362
    %v364 = vpop.f32.mrf.mxu0
    %365 = vdwg.mxu0
    %366 = vst [vmem:[#allocation10] sm:$0xff] %v363
    // Predicated region
    $region46: #{tpu_custom_call.1} parent=1 // pred_check
      _
    $region47: #{tpu_custom_call.1} parent=1 // pred_check_branch
      %368 = sbr.rel (0) target = $region49
    $region48: #{tpu_custom_call.1} parent=1 // pred_region
      %s370 = ssub.s32 128, 128
      %371 = vsyncadd [#allocation4], %s370
      %s373 = sshll.u32 [#allocation10], 4
      %s374 = int_to_ptr.vmem [resolvable:$true] %s373
      %376 = dma.vmem_to_hbm [thread:$0]  %s374, 128, %s7, [#allocation4]
    $region49: #{tpu_custom_call.1} parent=1 // pred_fallthru
      _
    // Predicated region
    $region50: #{tpu_custom_call.1} parent=1 // pred_check
      _
    $region51: #{tpu_custom_call.1} parent=1 // pred_check_branch
      %378 = sbr.rel (0) target = $region53
    $region52: #{tpu_custom_call.1} parent=1 // pred_region
      %379 = dma.done [#allocation4], 128
    $region53: #{tpu_custom_call.1} parent=1 // pred_fallthru
      _
    %380 = vsyncpa [#allocation3], 1
    %381 = vsyncpa [#allocation6], 1
    %382 = vsyncpa [#allocation9], 1
    %383 = vsyncpa [#allocation4], 1

</llo_original>
